<compile_context>
chip_gen: v6e
topology: v6e:2x2x1
jax: 0.10.0
libtpu: 0.0.40
codegen_flags: <defaults>
</compile_context>

<pallas_src>
import functools

import jax
import jax.numpy as jnp
from jax import lax
from jax.experimental import pallas as pl
from jax.experimental.pallas import tpu as pltpu

_LANE = 128
_SENTINEL = -1          # int8 label value marking "no sample in this lane"


def _cdiv(a, b):
    return -(-a // b)


def _round_up(x, m):
    return ((x + m - 1) // m) * m


@functools.lru_cache(maxsize=None)
def _tpu_defaults():
    """Best-effort (num_tensorcores, vmem_capacity_bytes-or-None)."""
    cores, vmem_cap = 1, None
    try:
        info = pltpu.get_tpu_info()
    except Exception:
        return cores, vmem_cap
    for name in ("num_tensorcores", "tensorcore_count", "num_cores",
                 "core_count", "cores_per_chip"):
        v = getattr(info, name, None)
        if isinstance(v, int) and 1 <= v <= 8:
            cores = v
            break
    v = getattr(info, "vmem_capacity_bytes", None)
    if isinstance(v, int) and v > 0:
        vmem_cap = v
    return cores, vmem_cap


def _vmem_limit_bytes():
    _, cap = _tpu_defaults()
    if cap is None:
        return 40 * 1024 * 1024          # safe even on 64 MiB (v7x) parts
    return max(24 * 1024 * 1024, min(int(0.75 * cap), 100 * 1024 * 1024))


@functools.lru_cache(maxsize=None)
def _bf16_pack_low_first():
    """True iff bitcast_convert_type((N,2) bf16 -> u32) puts element 0 in the
    low 16 bits (the in-kernel unpack keys off this)."""
    probe = lax.bitcast_convert_type(
        jnp.array([[1.0, 0.0]], dtype=jnp.bfloat16), jnp.uint32)
    return int(jax.device_get(probe)[0]) == 0x3F80


@functools.lru_cache(maxsize=None)
def _roll_next_lane_shift():
    """pltpu.roll shift that maps lane l+1 onto lane l along a 128-lane axis."""
    def k(x_ref, o_ref):
        o_ref[...] = pltpu.roll(x_ref[...], shift=1, axis=1)
    x = lax.broadcasted_iota(jnp.float32, (8, _LANE), 1)
    y = pl.pallas_call(
        k, out_shape=jax.ShapeDtypeStruct((8, _LANE), jnp.float32))(x)
    v = int(jax.device_get(y)[0, 0])
    assert v in (1, 127), f"unexpected pltpu.roll semantics: lane0 -> {v}"
    return 127 if v == 127 else 1


def _focal_weight(base, gamma):
    g = float(gamma)
    if g == 2.0:
        return base * base
    if g == 1.0:
        return base
    if g == 0.0:
        return jnp.ones_like(base)
    return jnp.exp(jnp.float32(g) * jnp.log(jnp.maximum(base, jnp.float32(1e-30))))


# --------------------------------------------------------------------------- #
# Kernels
# --------------------------------------------------------------------------- #
def _focal_c2_kernel(preds_ref, labels_ref, out_ref, acc_ref, *,
                     packed, low_first, next_shift, alpha0, alpha1, gamma,
                     k_inner, scale):
    """Binary (C==2) focal loss; samples lane-dense, no transposed inputs."""
    step = pl.program_id(1)

    @pl.when(step == 0)
    def _():
        acc_ref[...] = jnp.zeros_like(acc_ref)
        out_ref[...] = jnp.zeros_like(out_ref)

    lab = labels_ref[...].astype(jnp.int32)

    if packed:
        # (tile_k, 128) uint32; each word is one sample's (x0, x1) bf16 pair.
        u = preds_ref[...]
        lo = pltpu.bitcast(jnp.left_shift(u, jnp.uint32(16)), jnp.float32)
        hi = pltpu.bitcast(jnp.bitwise_and(u, jnp.uint32(0xFFFF0000)),
                           jnp.float32)
        x0, x1 = (lo, hi) if low_first else (hi, lo)
        delta = x0 - x1
    else:
        # (tile_k, 128) native dtype, lanes = (x0, x1, x0, x1, ...).  Even lanes
        # carry real samples (their label sits at the same lane); odd lanes hold
        # the sentinel label and are dropped by the `valid` select below.
        xi = preds_ref[...].astype(jnp.float32)
        nxt = pltpu.roll(xi, shift=next_shift, axis=1)   # lane l+1 -> lane l
        delta = xi - nxt                                 # x0 - x1 on even lanes

    is0 = lab == 0
    is1 = lab == 1
    valid = jnp.logical_or(is0, is1)
    sign = jnp.where(is0, jnp.float32(1.0), jnp.float32(-1.0))
    d = sign * delta                                     # x_label - x_other
    # p_t = sigmoid(d); -log p_t = softplus(-d).  One exp + one log per lane.
    e = jnp.exp(-jnp.abs(d))
    inv = pl.reciprocal(1.0 + e, approx=True)            # EUP slot
    p_t = jnp.where(d >= 0, jnp.float32(1.0), e) * inv
    neg_logp = jnp.log(1.0 + e) - jnp.minimum(d, jnp.float32(0.0))
    a_sel = jnp.where(is0, jnp.float32(alpha0), jnp.float32(alpha1))
    base = jnp.maximum(1.0 - p_t, 0.0)
    focal = _focal_weight(base, gamma)
    loss = jnp.where(valid, a_sel * (focal * neg_logp), jnp.float32(0.0))

    # Vector accumulator: fold (tile_k,128) -> (8,128) with VPU adds only.
    acc_ref[...] += jnp.sum(loss.reshape(-1, 8, _LANE), axis=0)

    @pl.when(step == k_inner - 1)
    def _():
        out_ref[...] = (jnp.zeros_like(out_ref)
                        + jnp.sum(acc_ref[...]) * jnp.float32(scale))


def _focal_general_kernel(preds_ref, labels_ref, out_ref, acc_ref, *,
                          num_classes, alpha, gamma, k_inner, scale):
    """Generic num_classes fallback; preds are class-major (C, tile_k, 128)."""
    step = pl.program_id(1)

    @pl.when(step == 0)
    def _():
        acc_ref[...] = jnp.zeros_like(acc_ref)
        out_ref[...] = jnp.zeros_like(out_ref)

    lab = labels_ref[...].astype(jnp.int32)

    m = preds_ref[0].astype(jnp.float32)
    for c in range(1, num_classes):
        m = jnp.maximum(m, preds_ref[c].astype(jnp.float32))

    # Single fused pass over the (small, static) class dim: only the running
    # denom / gathered values stay live (fewer full-tile temporaries).
    denom = None
    p_sel = xs_sel = a_sel = valid = None
    for c in range(num_classes):
        xs = preds_ref[c].astype(jnp.float32) - m
        e = jnp.exp(xs)
        denom = e if denom is None else denom + e
        sel = lab == c
        if c == 0:
            p_sel, xs_sel, valid = e, xs, sel
            a_sel = jnp.where(sel, jnp.float32(alpha[0]), jnp.float32(0.0))
        else:
            p_sel = jnp.where(sel, e, p_sel)
            xs_sel = jnp.where(sel, xs, xs_sel)
            a_sel = jnp.where(sel, jnp.float32(alpha[c]), a_sel)
            valid = jnp.logical_or(valid, sel)

    neg_logp = jnp.log(denom) - xs_sel                    # -log_softmax[label]
    p_t = p_sel * pl.reciprocal(denom, approx=True)       # softmax[label]
    base = jnp.maximum(1.0 - p_t, 0.0)
    focal = _focal_weight(base, gamma)
    loss = jnp.where(valid, a_sel * (focal * neg_logp), jnp.float32(0.0))

    acc_ref[...] += jnp.sum(loss.reshape(-1, 8, _LANE), axis=0)

    @pl.when(step == k_inner - 1)
    def _():
        out_ref[...] = (jnp.zeros_like(out_ref)
                        + jnp.sum(acc_ref[...]) * jnp.float32(scale))


# --------------------------------------------------------------------------- #
# Wrapper
# --------------------------------------------------------------------------- #
def _common_grid(r_rows, tile_cap, tile_rows, num_cores):
    if tile_rows:
        tile_k = _round_up(int(tile_rows), 32)
    else:
        tile_k = min(tile_cap, _round_up(_cdiv(r_rows, max(1, num_cores)), 32))
    r_padded = max(r_rows, tile_k)       # tiny inputs: one fully in-bounds tile
    blocks = _cdiv(r_padded, tile_k)
    num_splits = max(1, min(num_cores, blocks))
    k_inner = _cdiv(blocks, num_splits)
    total_blocks = num_splits * k_inner
    return tile_k, r_padded, blocks, num_splits, k_inner, total_blocks


@functools.partial(jax.jit,
                   static_argnames=("mode", "num_classes", "alpha", "gamma",
                                    "size_average", "next_shift", "low_first",
                                    "tile_rows"))
def _focal_loss_impl(preds, labels, *, mode, num_classes, alpha, gamma,
                     size_average, next_shift, low_first, tile_rows):
    c = num_classes
    preds2d = preds.reshape(-1, c)
    n = int(preds2d.shape[0])
    labels_i8 = labels.reshape(-1).astype(jnp.int8)
    num_cores, _ = _tpu_defaults()
    scale = (1.0 / float(n)) if size_average else 1.0

    if mode == "classmajor":
        # Generic C: class-major lane-dense layout; pad+transpose+reshape fuse
        # into one pass because the whole wrapper is jitted.
        r = _cdiv(n, _LANE)
        (tile_k, _r_padded, _blocks, num_splits, k_inner,
         total_blocks) = _common_grid(r, 1024, tile_rows, num_cores)
        n_pad = total_blocks * tile_k * _LANE
        preds_blk = jnp.pad(preds2d.T, ((0, 0), (0, n_pad - n))).reshape(
            c, n_pad // _LANE, _LANE)
        labels_blk = jnp.pad(labels_i8, (0, n_pad - n),
                             constant_values=_SENTINEL).reshape(
            n_pad // _LANE, _LANE)
        kernel = functools.partial(
            _focal_general_kernel, num_classes=c, alpha=alpha, gamma=gamma,
            k_inner=k_inner, scale=scale)
        in_specs = [
            pl.BlockSpec((c, tile_k, _LANE),
                         lambda s, i: (0, s * k_inner + i, 0)),
            pl.BlockSpec((tile_k, _LANE),
                         lambda s, i: (s * k_inner + i, 0)),
        ]
        operands = (preds_blk, labels_blk)
    else:
        # C == 2 fast paths: preds consumed in natural memory order.
        packed = mode == "packed16"
        if packed:
            flat = lax.bitcast_convert_type(preds2d, jnp.uint32)      # (N,)
            lab_flat = labels_i8
        else:
            flat = preds2d.reshape(-1)                                # (2N,)
            lab_flat = jnp.stack(
                [labels_i8, jnp.full_like(labels_i8, _SENTINEL)],
                axis=-1).reshape(-1)
        flat_len = int(flat.shape[0])
        r = _cdiv(flat_len, _LANE)
        (tile_k, r_padded, blocks, num_splits, k_inner,
         total_blocks) = _common_grid(r, 2048, tile_rows, num_cores)
        pad = r_padded * _LANE - flat_len
        if pad:
            flat = jnp.pad(flat, (0, pad))
        preds_blk = flat.reshape(r_padded, _LANE)
        r_lab = total_blocks * tile_k
        lab_flat = jnp.pad(lab_flat, (0, r_lab * _LANE - int(lab_flat.shape[0])),
                           constant_values=_SENTINEL)
        labels_blk = lab_flat.reshape(r_lab, _LANE)
        max_pred_block = blocks - 1
        kernel = functools.partial(
            _focal_c2_kernel, packed=packed, low_first=low_first,
            next_shift=next_shift, alpha0=alpha[0], alpha1=alpha[1],
            gamma=gamma, k_inner=k_inner, scale=scale)
        in_specs = [
            pl.BlockSpec((tile_k, _LANE),
                         lambda s, i: (jnp.minimum(s * k_inner + i,
                                                   max_pred_block), 0)),
            pl.BlockSpec((tile_k, _LANE),
                         lambda s, i: (s * k_inner + i, 0)),
        ]
        operands = (preds_blk, labels_blk)

    partials = pl.pallas_call(
        kernel,
        out_shape=jax.ShapeDtypeStruct((num_splits, 1, 1), jnp.float32),
        grid_spec=pltpu.PrefetchScalarGridSpec(
            num_scalar_prefetch=0,
            grid=(num_splits, k_inner),
            in_specs=in_specs,
            out_specs=pl.BlockSpec((1, 1, 1), lambda s, i: (s, 0, 0)),
            scratch_shapes=[pltpu.VMEM((8, _LANE), jnp.float32)],
        ),
        compiler_params=pltpu.CompilerParams(
            dimension_semantics=("parallel", "arbitrary"),
            vmem_limit_bytes=int(_vmem_limit_bytes())),
    )(*operands)

    # Per-split partials (already scaled when size_average).
    return jnp.sum(partials)


def focal_loss_pallas(preds, labels, alpha=0.25, gamma=2.0, num_classes=2,
                      size_average=True, tile_rows=None):
    """Mirror of the PyTorch focal_loss.forward (returns a scalar loss)."""
    c = int(preds.shape[-1])
    if isinstance(alpha, (list, tuple)):
        alpha_t = tuple(float(a) for a in alpha)
    else:
        alpha_t = (float(alpha),) + (1.0 - float(alpha),) * (c - 1)
    assert len(alpha_t) == c, "alpha length must match the class dim"

    if c == 2 and preds.dtype == jnp.bfloat16:
        mode, next_shift, low_first = "packed16", 0, _bf16_pack_low_first()
    elif c == 2:
        mode, next_shift, low_first = "interleaved", _roll_next_lane_shift(), True
    else:
        mode, next_shift, low_first = "classmajor", 0, True

    return _focal_loss_impl(
        preds, labels, mode=mode, num_classes=c, alpha=alpha_t,
        gamma=float(gamma), size_average=bool(size_average),
        next_shift=int(next_shift), low_first=bool(low_first),
        tile_rows=None if tile_rows is None else int(tile_rows))


# --------------------------------------------------------------------------- #
# Pure-JAX reference (PyTorch semantics)
# --------------------------------------------------------------------------- #
def _focal_loss_ref(preds, labels, alpha=0.25, gamma=2.0, size_average=True):
    c = preds.shape[-1]
    if isinstance(alpha, (list, tuple)):
        alpha_vec = jnp.asarray(alpha, dtype=jnp.float32)
    else:
        alpha_vec = jnp.concatenate([
            jnp.full((1,), alpha, dtype=jnp.float32),
            jnp.full((c - 1,), 1.0 - alpha, dtype=jnp.float32),
        ])
    p = preds.reshape(-1, c).astype(jnp.float32)
    lab = labels.reshape(-1).astype(jnp.int32)
    logsoft = jax.nn.log_softmax(p, axis=1)
    logp = jnp.take_along_axis(logsoft, lab[:, None], axis=1)[:, 0]
    psoft = jnp.exp(logp)
    a = alpha_vec[lab]
    loss = a * (jnp.power(1.0 - psoft, gamma) * (-logp))
    return jnp.mean(loss) if size_average else jnp.sum(loss)


if __name__ == "__main__":
    key = jax.random.PRNGKey(0)
    k1, k2, k3, k4 = jax.random.split(key, 4)
    tol = dict(atol=5e-3, rtol=5e-3)

    # 1) Small f32, C=2 (interleaved zero-transpose path), mean and sum.
    preds = jax.random.normal(k1, (2, 8, 2), dtype=jnp.float32)
    labels = jax.random.randint(k2, (2, 8), 0, 2, dtype=jnp.int32)
    out = jax.block_until_ready(focal_loss_pallas(preds, labels))
    ref = _focal_loss_ref(preds, labels)
    assert jnp.allclose(out, ref, **tol), (out, ref)

    out_s = jax.block_until_ready(
        focal_loss_pallas(preds, labels, size_average=False))
    ref_s = _focal_loss_ref(preds, labels, size_average=False)
    assert jnp.allclose(out_s, ref_s, **tol), (out_s, ref_s)

    # 2) Larger f32 with an alpha list and a forced small tile to exercise the
    #    multi-step accumulator, the ragged (partially OOB) last block, the
    #    clamped preds index map and sentinel-label padding.
    preds2 = jax.random.normal(k3, (4, 520, 2), dtype=jnp.float32)
    labels2 = jax.random.randint(k4, (4, 520), 0, 2, dtype=jnp.int32)
    out2 = jax.block_until_ready(
        focal_loss_pallas(preds2, labels2, alpha=[0.4, 0.6], tile_rows=32))
    ref2 = _focal_loss_ref(preds2, labels2, alpha=[0.4, 0.6])
    assert jnp.allclose(out2, ref2, **tol), (out2, ref2)

    # 3) bf16 preds, C=2 (packed u32 zero-relayout path).
    preds_bf = preds2.astype(jnp.bfloat16)
    out3 = jax.block_until_ready(focal_loss_pallas(preds_bf, labels2))
    ref3 = _focal_loss_ref(preds_bf, labels2)
    assert jnp.allclose(out3, ref3, **tol), (out3, ref3)

    # 4) num_classes=3 (class-major fallback kernel).
    preds3 = jax.random.normal(k1, (2, 200, 3), dtype=jnp.float32)
    labels3 = jax.random.randint(k2, (2, 200), 0, 3, dtype=jnp.int32)
    out4 = jax.block_until_ready(
        focal_loss_pallas(preds3, labels3, alpha=0.25, num_classes=3))
    ref4 = _focal_loss_ref(preds3, labels3, alpha=0.25)
    assert jnp.allclose(out4, ref4, **tol), (out4, ref4)

    print("KERNEL_OK")
</pallas_src>

<mosaic_0001>
module attributes {stable_mosaic.version = 11 : i64} {
  func.func @k(%arg0: memref<8x128xf32, #tpu.memory_space<vmem>>, %arg1: memref<8x128xf32, #tpu.memory_space<vmem>>) attributes {dimension_semantics = [], scalar_prefetch = 0 : i64, scratch_operands = 0 : i64, tpu.core_type = #tpu.core_type<tc>} {
    %c0 = arith.constant 0 : index
    %c0_0 = arith.constant 0 : index
    %0 = vector.load %arg0[%c0, %c0_0] : memref<8x128xf32, #tpu.memory_space<vmem>>, vector<8x128xf32>
    %c1_i32 = arith.constant 1 : i32
    %1 = tpu.dynamic_rotate %0 by %c1_i32 dim 1 : vector<8x128xf32>, i32 -> vector<8x128xf32>
    %c0_1 = arith.constant 0 : index
    %c0_2 = arith.constant 0 : index
    %2 = vector.load %arg1[%c0_1, %c0_2] : memref<8x128xf32, #tpu.memory_space<vmem>>, vector<8x128xf32>
    tpu.vector_store %arg1[%c0_1, %c0_2], %1 {strides = array<i32>} : memref<8x128xf32, #tpu.memory_space<vmem>>, vector<8x128xf32>,
    return
  }
}

</mosaic_0001>

<llo_original>
// kernel: tpu_custom_call.1
$region0: #{tpu_custom_call.1}
  #allocation0 [shape = 'u32[]', space=smem, size = 0x4, offset = 0x4, fixed_abs, tag = 'smem constant byte address 0x4 - core index']
  #allocation1 [shape = 'u32[144,128]{1,0:T(1,128)}', space=vmem, size = 0x12000, scoped, tag = 'internal scratch']
  %s0 = inlined_call_operand.hbm [shape: f32[8,128], index: 0, kind: input, shape index: {}]
  %s1 = inlined_call_operand.hbm [shape: f32[8,128], index: 1, kind: output, shape index: {}]
  %s2 = sld [smem:[#allocation0]]
  $region18: #{tpu_custom_call.1} parent=0
    _
  %s4 = ssub.s32 1, %s2
  %s5 = scalar_select 0, %s4, %s2
  $region1: #{tpu_custom_call.1} parent=0
    #allocation2 [shape = 'u8[4096]{0}', space=vmem, size = 0x1000, scoped, tag = 'input window, operand 0, single buffered']
    #allocation3 [shape = 's32[1]{0}', space=sflag, size = 0x4, scoped, tag = 'scoped memory for tpu_custom_call.1']
    #allocation4 [shape = 's32[1]{0}', space=sflag, size = 0x4, scoped, tag = 'scoped memory for tpu_custom_call.1']
    #allocation5 [shape = 'u8[4096]{0}', space=vmem, size = 0x1000, scoped, tag = 'output window, operand 0, single buffered']
    %6 = vsyncpa [#allocation3], 0
    %7 = vsyncpa [#allocation4], 0
    // Predicated region
    $region2: #{tpu_custom_call.1} parent=1 // pred_check
      _
    $region3: #{tpu_custom_call.1} parent=1 // pred_check_branch
      %9 = sbr.rel (0) target = $region5
    $region4: #{tpu_custom_call.1} parent=1 // pred_region
      %s11 = ssub.s32 128, 128
      %12 = vsyncadd [#allocation3], %s11
      %s14 = sshll.u32 [#allocation2], 4
      %s15 = int_to_ptr.vmem [resolvable:$true] %s14
      %17 = dma.hbm_to_vmem [thread:$0]  %s0, 128, %s15, [#allocation3]
    $region5: #{tpu_custom_call.1} parent=1 // pred_fallthru
      _
    // Predicated region
    $region6: #{tpu_custom_call.1} parent=1 // pred_check
      _
    $region7: #{tpu_custom_call.1} parent=1 // pred_check_branch
      %19 = sbr.rel (0) target = $region9
    $region8: #{tpu_custom_call.1} parent=1 // pred_region
      %20 = dma.done [#allocation3], 128
    $region9: #{tpu_custom_call.1} parent=1 // pred_fallthru
      _
    %v21 = vld [vmem:[#allocation2] sm:$0xff]
    %22 = vrot.lane.b32.xlu0 %v21, 1
    %v23 = vpop.permute.xlu0 %22
    %24 = vst [vmem:[#allocation5] sm:$0xff] %v23
    // Predicated region
    $region10: #{tpu_custom_call.1} parent=1 // pred_check
      _
    $region11: #{tpu_custom_call.1} parent=1 // pred_check_branch
      %26 = sbr.rel (0) target = $region13
    $region12: #{tpu_custom_call.1} parent=1 // pred_region
      %s28 = ssub.s32 128, 128
      %29 = vsyncadd [#allocation4], %s28
      %s31 = sshll.u32 [#allocation5], 4
      %s32 = int_to_ptr.vmem [resolvable:$true] %s31
      %34 = dma.vmem_to_hbm [thread:$0]  %s32, 128, %s1, [#allocation4]
    $region13: #{tpu_custom_call.1} parent=1 // pred_fallthru
      _
    // Predicated region
    $region14: #{tpu_custom_call.1} parent=1 // pred_check
      _
    $region15: #{tpu_custom_call.1} parent=1 // pred_check_branch
      %36 = sbr.rel (0) target = $region17
    $region16: #{tpu_custom_call.1} parent=1 // pred_region
      %37 = dma.done [#allocation4], 128
    $region17: #{tpu_custom_call.1} parent=1 // pred_fallthru
      _
    %38 = vsyncpa [#allocation3], 1
    %39 = vsyncpa [#allocation4], 1

</llo_original>
